<compile_context>
chip_gen: v5e
topology: v5e:2x2
jax: 0.10.0
libtpu: 0.0.40
codegen_flags: <defaults>
</compile_context>

<pallas_src>
import functools

import jax
import jax.numpy as jnp
from jax.experimental import pallas as pl
from jax.experimental.pallas import tpu as pltpu


# ---------------------------------------------------------------------------
# Kernel
# ---------------------------------------------------------------------------
def _head_kernel(x_ref, w_ref, b_ref, o_ref, acc_ref, *, compute_dtype):
    # x_ref: [tm, tk] (original dtype), w_ref: [tk, tn] compute_dtype,
    # b_ref: [1, tn] f32, o_ref: [tm, tn] out dtype, acc_ref: [tm, tn] f32 scratch.
    k = pl.program_id(2)

    @pl.when(k == 0)
    def _():
        # Initialize the accumulator with the broadcast bias: removes the bias add
        # from the finalize/store path.
        acc_ref[...] = jnp.broadcast_to(b_ref[...], acc_ref.shape).astype(jnp.float32)

    acc_ref[...] += jnp.dot(
        x_ref[...].astype(compute_dtype),          # in-kernel cast (hidden under DMA/MXU)
        w_ref[...],
        preferred_element_type=jnp.float32)

    @pl.when(k == pl.num_programs(2) - 1)
    def _():
        o_ref[...] = acc_ref[...].astype(o_ref.dtype)
    # TODO(synk): head_dropout is a no-op at inference; training-time dropout not implemented.


# ---------------------------------------------------------------------------
# Tiling plans (shared between packing and forward so padded shapes agree)
# ---------------------------------------------------------------------------
def _round_up(x, m):
    return (x + m - 1) // m * m


def _largest_divisor_tile(dim, cap, unit):
    """Largest multiple of `unit` that divides `dim` and is <= cap (0 if none)."""
    best = 0
    t = unit
    while t <= min(dim, cap):
        if dim % t == 0:
            best = t
        t += unit
    return best


def _padded_tile(dim, cap, unit, max_pad_frac=0.125):
    """Largest tile (multiple of `unit`, <= cap) whose padded size stays within
    `max_pad_frac` of the minimal unit-rounded padding.  Returns (tile, padded_dim)."""
    base = _round_up(dim, unit)
    budget = base + int(base * max_pad_frac)
    best_t, best_pad = unit, base
    t = unit
    while t <= cap:
        pad = _round_up(dim, t)
        if pad <= budget:
            best_t, best_pad = t, pad
        t += unit
    return best_t, best_pad


def _plan_n(tw, cap=1024):
    """N (target_window) tiling.  Weights are pre-padded once, so padding is cheap."""
    return _padded_tile(tw, cap, 128)          # (tn, n_pad)


def _plan_k(nf, individual, cap=1024, full_cap=2048):
    """K (nf) tiling.  Prefer choices that need NO padding of x."""
    if nf % 128 == 0:
        tk = _largest_divisor_tile(nf, cap, 128)
        if tk >= 512 or tk == nf:
            return tk, nf                      # clean divisor, no padding anywhere
    if not individual and nf <= full_cap:
        # Shared path: a full-extent K block (block dim == array dim) is always
        # legal and avoids padding x even when nf % 128 != 0.
        return nf, nf
    # Fall back: pad K up to a multiple of a large tile (one zero-pad copy of x
    # per call; only hit when nf has no good 128-multiple divisor).
    return _padded_tile(nf, cap, 128)


def _plan_m(m, cap=512):
    """M (= bs * n_vars) tiling for the shared path."""
    if m <= cap:
        return m, m                            # single full-extent block, no padding
    tm = _largest_divisor_tile(m, cap, 8)
    if tm >= 128:
        return tm, m
    return _padded_tile(m, cap, 8)


# ---------------------------------------------------------------------------
# One-time parameter packing (call at parameter-load time, NOT per forward)
# ---------------------------------------------------------------------------
def pack_head_params(weights, biases, *, individual, compute_dtype=jnp.bfloat16):
    """
    weights : [n_vars, nf, tw] if individual else [1, nf, tw]   (W = W_pytorch.T)
    biases  : [n_vars, 1, tw]  if individual else [1, 1, tw]
    Returns (w_packed, b_packed):
      w_packed : [n_vars|1, k_pad, n_pad]  compute_dtype, zero-padded tails
      b_packed : [n_vars|1, 1, n_pad]      float32, zero-padded tail
    Use compute_dtype=jnp.float32 as a full-precision escape hatch.
    """
    nv, nf, tw = weights.shape
    _, k_pad = _plan_k(nf, individual)
    _, n_pad = _plan_n(tw)
    w = weights.astype(compute_dtype)
    if (k_pad != nf) or (n_pad != tw):
        w = jnp.pad(w, ((0, 0), (0, k_pad - nf), (0, n_pad - tw)))
    b = biases.astype(jnp.float32)
    if n_pad != tw:
        b = jnp.pad(b, ((0, 0), (0, 0), (0, n_pad - tw)))
    return w, b


# ---------------------------------------------------------------------------
# Forward
# ---------------------------------------------------------------------------
def flatten_head_forward(x, w_packed, b_packed, *, individual, target_window):
    """
    x        : [bs, n_vars, d_model, patch_num]   (original dtype; NOT pre-cast)
    w_packed, b_packed : from pack_head_params
    returns  : [bs, n_vars, target_window], dtype of x
    """
    assert x.ndim == 4
    bs, n_vars, d_model, patch_num = x.shape
    nf = d_model * patch_num
    tw = target_window
    out_dtype = x.dtype
    compute_dtype = w_packed.dtype

    nv_w, k_pad, n_pad = w_packed.shape
    tk, k_pad_plan = _plan_k(nf, individual)
    tn, n_pad_plan = _plan_n(tw)
    assert (k_pad, n_pad) == (k_pad_plan, n_pad_plan), "params not packed for these shapes"
    kt = k_pad // tk
    nt = n_pad // tn

    kernel = functools.partial(_head_kernel, compute_dtype=compute_dtype)

    if individual:
        assert nv_w == n_vars
        # flatten(start_dim=-2) is a free reshape.  Pad only when required:
        # bs -> multiple of 8 (sublane-dense acc / unmasked stores) and the rare
        # K tail, fused into one pad.  In this path weights dominate HBM traffic.
        x3 = x.reshape(bs, n_vars, nf)
        bs_pad = _round_up(bs, 8)
        if (k_pad != nf) or (bs_pad != bs):
            x3 = jnp.pad(x3, ((0, bs_pad - bs), (0, 0), (0, k_pad - nf)))
        x2 = x3.reshape(bs_pad, n_vars * k_pad)

        grid = (n_vars, nt, kt)
        x_spec = pl.BlockSpec((bs_pad, tk), lambda v, n, k: (0, v * kt + k))
        w_spec = pl.BlockSpec((pl.Squeezed(), tk, tn), lambda v, n, k: (v, k, n))
        b_spec = pl.BlockSpec((pl.Squeezed(), 1, tn), lambda v, n, k: (v, 0, n))
        o_spec = pl.BlockSpec((bs_pad, tn), lambda v, n, k: (0, v * nt + n))
        out_shape = jax.ShapeDtypeStruct((bs_pad, n_vars * n_pad), out_dtype)
        acc_shape = (bs_pad, tn)
    else:
        assert nv_w == 1
        m = bs * n_vars
        tm, m_pad = _plan_m(m)
        mt = m_pad // tm

        # Megacore (v7x has 2 TensorCores): guarantee >= 2 blocks on a parallel
        # axis when possible.  Costs one extra grid step on 1-TC chips.
        if mt == 1 and nt == 1:
            if tm >= 16 and tm % 16 == 0:
                tm //= 2
            elif tn >= 256:
                tn //= 2
            mt = m_pad // tm
            nt = n_pad // tn

        x2 = x.reshape(m, nf)                  # free reshape, original dtype
        if (m_pad != m) or (k_pad != nf):
            x2 = jnp.pad(x2, ((0, m_pad - m), (0, k_pad - nf)))

        grid = (mt, nt, kt)
        x_spec = pl.BlockSpec((tm, tk), lambda i, n, k: (i, k))
        w_spec = pl.BlockSpec((pl.Squeezed(), tk, tn), lambda i, n, k: (0, k, n))
        b_spec = pl.BlockSpec((pl.Squeezed(), 1, tn), lambda i, n, k: (0, 0, n))
        o_spec = pl.BlockSpec((tm, tn), lambda i, n, k: (i, n))
        out_shape = jax.ShapeDtypeStruct((m_pad, n_pad), out_dtype)
        acc_shape = (tm, tn)

    out = pl.pallas_call(
        kernel,
        out_shape=out_shape,
        grid_spec=pltpu.PrefetchScalarGridSpec(
            num_scalar_prefetch=0,
            grid=grid,
            in_specs=[x_spec, w_spec, b_spec],
            out_specs=o_spec,
            scratch_shapes=[pltpu.VMEM(acc_shape, jnp.float32)],
        ),
        compiler_params=pltpu.CompilerParams(
            dimension_semantics=("parallel", "parallel", "arbitrary"),
        ),
    )(x2, w_packed, b_packed)

    if individual:
        out = out.reshape(-1, n_vars, n_pad)[:bs, :, :tw]
    else:
        out = out[:bs * n_vars, :tw].reshape(bs, n_vars, tw)
    return out


# ---------------------------------------------------------------------------
# Reference + demo
# ---------------------------------------------------------------------------
def _reference(x, weights, biases, *, individual):
    bs, n_vars, d_model, patch_num = x.shape
    nf = d_model * patch_num
    z = x.reshape(bs, n_vars, nf)  # flatten(start_dim=-2)
    if individual:
        outs = [z[:, i, :] @ weights[i] + biases[i, 0] for i in range(n_vars)]
        return jnp.stack(outs, axis=1)
    return z @ weights[0] + biases[0, 0]


if __name__ == "__main__":
    # Small shapes consistent with the PatchTST head.
    bs, n_vars, d_model, patch_num = 2, 4, 16, 8
    nf = d_model * patch_num          # 128
    target_window = 24

    key = jax.random.PRNGKey(0)
    kx, kw, kb = jax.random.split(key, 3)

    x = jax.random.normal(kx, (bs, n_vars, d_model, patch_num), dtype=jnp.float32)

    # nn.Linear(nf, target_window) per variable, stored as W = W_pt.T : [nf, tw].
    w_ind = jax.random.normal(kw, (n_vars, nf, target_window), dtype=jnp.float32) * 0.02
    b_ind = jax.random.normal(kb, (n_vars, 1, target_window), dtype=jnp.float32) * 0.02
    w_shared = w_ind[:1]
    b_shared = b_ind[:1]

    # One-time parameter packing (bf16 cast + zero-pad), done outside the forward.
    wp_ind, bp_ind = pack_head_params(w_ind, b_ind, individual=True)
    wp_shr, bp_shr = pack_head_params(w_shared, b_shared, individual=False)

    # individual=True path
    out_ind = flatten_head_forward(x, wp_ind, bp_ind, individual=True,
                                   target_window=target_window)
    jax.block_until_ready(out_ind)
    ref_ind = _reference(x, w_ind, b_ind, individual=True)

    # individual=False path (shared linear)
    out_shr = flatten_head_forward(x, wp_shr, bp_shr, individual=False,
                                   target_window=target_window)
    jax.block_until_ready(out_shr)
    ref_shr = _reference(x, w_shared, b_shared, individual=False)

    assert out_ind.shape == (bs, n_vars, target_window)
    assert out_shr.shape == (bs, n_vars, target_window)
    # bf16 operands (f32 accumulation) -> loosened tolerance vs. f32 reference.
    assert jnp.allclose(out_ind, ref_ind, atol=2e-2, rtol=2e-2)
    assert jnp.allclose(out_shr, ref_shr, atol=2e-2, rtol=2e-2)

    print("KERNEL_OK")
</pallas_src>

<mosaic_0001>
module attributes {stable_mosaic.version = 11 : i64} {
  func.func @_head_kernel(%arg0: i32, %arg1: i32, %arg2: i32, %arg3: memref<8x128xf32, #tpu.memory_space<vmem>>, %arg4: memref<1x128x128xbf16, #tpu.memory_space<vmem>>, %arg5: memref<1x1x128xf32, #tpu.memory_space<vmem>>, %arg6: memref<8x128xf32, #tpu.memory_space<vmem>>, %arg7: memref<8x128xf32, #tpu.memory_space<vmem>>) attributes {dimension_semantics = [#tpu.dimension_semantics<parallel>, #tpu.dimension_semantics<parallel>, #tpu.dimension_semantics<arbitrary>], iteration_bounds = array<i64: 4, 1, 1>, scalar_prefetch = 0 : i64, scratch_operands = 1 : i64, tpu.core_type = #tpu.core_type<tc>, window_params = [{transform_indices = @transform_0, window_bounds = array<i64: 8, 128>}, {transform_indices = @transform_1, window_bounds = array<i64: 1, 128, 128>}, {transform_indices = @transform_2, window_bounds = array<i64: 1, 1, 128>}, {transform_indices = @transform_3, window_bounds = array<i64: 8, 128>}]} {
    %c0_i32 = arith.constant 0 : i32
    %0 = arith.cmpi eq, %arg2, %c0_i32 : i32
    %1 = arith.extui %0 : i1 to i32
    %c0_i32_0 = arith.constant 0 : i32
    %2 = arith.cmpi ne, %1, %c0_i32_0 : i32
    scf.if %2 {
      %c0_11 = arith.constant 0 : index
      %c0_12 = arith.constant 0 : index
      %c0_13 = arith.constant 0 : index
      %14 = vector.load %arg5[%c0_11, %c0_12, %c0_13] : memref<1x1x128xf32, #tpu.memory_space<vmem>>, vector<1x1x128xf32>
      %15 = vector.shape_cast %14 : vector<1x1x128xf32> to vector<1x128xf32>
      %16 = vector.shape_cast %15 : vector<1x128xf32> to vector<1x128xf32>
      %17 = vector.broadcast %16 : vector<1x128xf32> to vector<8x128xf32>
      %c0_14 = arith.constant 0 : index
      %c0_15 = arith.constant 0 : index
      %18 = vector.load %arg7[%c0_14, %c0_15] : memref<8x128xf32, #tpu.memory_space<vmem>>, vector<8x128xf32>
      tpu.vector_store %arg7[%c0_14, %c0_15], %17 {strides = array<i32>} : memref<8x128xf32, #tpu.memory_space<vmem>>, vector<8x128xf32>,
    } else {
    }
    %c0 = arith.constant 0 : index
    %c0_1 = arith.constant 0 : index
    %3 = vector.load %arg7[%c0, %c0_1] : memref<8x128xf32, #tpu.memory_space<vmem>>, vector<8x128xf32>
    %c0_2 = arith.constant 0 : index
    %c0_3 = arith.constant 0 : index
    %4 = vector.load %arg3[%c0_2, %c0_3] : memref<8x128xf32, #tpu.memory_space<vmem>>, vector<8x128xf32>
    %5 = arith.truncf %4 : vector<8x128xf32> to vector<8x128xbf16>
    %c0_4 = arith.constant 0 : index
    %c0_5 = arith.constant 0 : index
    %c0_6 = arith.constant 0 : index
    %6 = vector.load %arg4[%c0_4, %c0_5, %c0_6] : memref<1x128x128xbf16, #tpu.memory_space<vmem>>, vector<1x128x128xbf16>
    %7 = vector.shape_cast %6 : vector<1x128x128xbf16> to vector<128x128xbf16>
    %cst = arith.constant dense<0.000000e+00> : vector<8x128xf32>
    %8 = tpu.matmul %5, %7, %cst {dimension_numbers = #tpu.dot_dimension_numbers<[1], [0], [0], [1], [0, 0, 1, 1], [], []>} : vector<8x128xbf16>, vector<128x128xbf16>, vector<8x128xf32> -> vector<8x128xf32>
    %9 = arith.addf %3, %8 : vector<8x128xf32>
    %c0_7 = arith.constant 0 : index
    %c0_8 = arith.constant 0 : index
    %10 = vector.load %arg7[%c0_7, %c0_8] : memref<8x128xf32, #tpu.memory_space<vmem>>, vector<8x128xf32>
    tpu.vector_store %arg7[%c0_7, %c0_8], %9 {strides = array<i32>} : memref<8x128xf32, #tpu.memory_space<vmem>>, vector<8x128xf32>,
    %c0_i32_9 = arith.constant 0 : i32
    %11 = arith.cmpi eq, %arg2, %c0_i32_9 : i32
    %12 = arith.extui %11 : i1 to i32
    %c0_i32_10 = arith.constant 0 : i32
    %13 = arith.cmpi ne, %12, %c0_i32_10 : i32
    scf.if %13 {
      %c0_11 = arith.constant 0 : index
      %c0_12 = arith.constant 0 : index
      %14 = vector.load %arg7[%c0_11, %c0_12] : memref<8x128xf32, #tpu.memory_space<vmem>>, vector<8x128xf32>
      %c0_13 = arith.constant 0 : index
      %c0_14 = arith.constant 0 : index
      %15 = vector.load %arg6[%c0_13, %c0_14] : memref<8x128xf32, #tpu.memory_space<vmem>>, vector<8x128xf32>
      tpu.vector_store %arg6[%c0_13, %c0_14], %14 {strides = array<i32>} : memref<8x128xf32, #tpu.memory_space<vmem>>, vector<8x128xf32>,
    } else {
    }
    return
  }
  func.func @transform_0(%arg0: i32, %arg1: i32, %arg2: i32) -> (i32, i32) {
    %c1_i32 = arith.constant 1 : i32
    %0 = arith.muli %arg0, %c1_i32 : i32
    %1 = arith.addi %0, %arg2 : i32
    %c0_i32 = arith.constant 0 : i32
    %c0_i32_0 = arith.constant 0 : i32
    return %c0_i32, %1 : i32, i32
  }
  func.func @transform_1(%arg0: i32, %arg1: i32, %arg2: i32) -> (i32, i32, i32) {
    %c0_i32 = arith.constant 0 : i32
    return %arg0, %arg2, %arg1 : i32, i32, i32
  }
  func.func @transform_2(%arg0: i32, %arg1: i32, %arg2: i32) -> (i32, i32, i32) {
    %c0_i32 = arith.constant 0 : i32
    %c0_i32_0 = arith.constant 0 : i32
    return %arg0, %c0_i32, %arg1 : i32, i32, i32
  }
  func.func @transform_3(%arg0: i32, %arg1: i32, %arg2: i32) -> (i32, i32) {
    %c1_i32 = arith.constant 1 : i32
    %0 = arith.muli %arg0, %c1_i32 : i32
    %1 = arith.addi %0, %arg1 : i32
    %c0_i32 = arith.constant 0 : i32
    %c0_i32_0 = arith.constant 0 : i32
    return %c0_i32, %1 : i32, i32
  }
}

</mosaic_0001>

<llo_original>
// kernel: tpu_custom_call.1
$region0: #{tpu_custom_call.1}
  #allocation0 [shape = 'u32[]', space=smem, size = 0x4, offset = 0x4, fixed_abs, tag = 'smem constant byte address 0x4 - core index']
  #allocation1 [shape = 'u32[72,128]{1,0:T(1,128)}', space=vmem, size = 0x9000, scoped, tag = 'internal scratch']
  #allocation2 [shape = 'f32[8,128]{1,0:T(8,128)}', space=vmem, size = 0x1000, scoped, tag = 'scratch operand']
  %s0 = inlined_call_operand.hbm [shape: f32[8,512], index: 0, kind: input, shape index: {}]
  %s1 = inlined_call_operand.hbm [shape: bf16[4,128,128], index: 1, kind: input, shape index: {}]
  %s2 = inlined_call_operand.hbm [shape: f32[4,1,128], index: 2, kind: input, shape index: {}]
  %s3 = inlined_call_operand.hbm [shape: f32[8,512], index: 3, kind: output, shape index: {}]
  %s4 = sld [smem:[#allocation0]]
  $region65: #{tpu_custom_call.1} parent=0
    _
  %s6 = ssub.s32 1, %s4
  %s7 = scalar_select 0, %s6, %s4
  $region1: #{tpu_custom_call.1} parent=0
    #allocation3 [shape = 'u8[8192]{0}', space=vmem, size = 0x2000, scoped, tag = 'input window, operand 0']
    #allocation4 [shape = 's32[2]{0}', space=sflag, size = 0x8, scoped, tag = 'scoped memory for tpu_custom_call.1']
    #allocation5 [shape = 's32[2]{0}', space=sflag, size = 0x8, scoped, tag = 'scoped memory for tpu_custom_call.1']
    #allocation6 [shape = 'u8[65536]{0}', space=vmem, size = 0x10000, scoped, tag = 'input window, operand 1']
    #allocation7 [shape = 's32[2]{0}', space=sflag, size = 0x8, scoped, tag = 'scoped memory for tpu_custom_call.1']
    #allocation8 [shape = 'u8[1024]{0}', space=vmem, size = 0x400, scoped, tag = 'input window, operand 2']
    #allocation9 [shape = 'u8[8192]{0}', space=vmem, size = 0x2000, scoped, tag = 'output window, operand 0']
    %8 = vsyncpa [#allocation4], 0
    %s9 = scalar_lea.sflag [#allocation4], 1
    %10 = vsyncpa %s9, 0
    %11 = vsyncpa [#allocation7], 0
    %s12 = scalar_lea.sflag [#allocation7], 1
    %13 = vsyncpa %s12, 0
    %14 = vsyncpa [#allocation5], 0
    %s15 = scalar_lea.sflag [#allocation5], 1
    %16 = vsyncpa %s15, 0
    loop: start=0, step=1, limit=6
    $region2: #{tpu_custom_call.1} parent=1 // loop_pre_header
      _
    $region3: #{tpu_custom_call.1} parent=1 // loop_header
      %s18 = sphi 0, %s22
      %p19 = scmp.ge.s32.totalorder %s18, 6
      %s25 = sphi 0, %s44
      %s26 = sphi 0, %s40
      %s27 = sphi 0, %s36
      %s28 = sphi 0, %s25
      %s29 = sphi 0, %s26
      %s30 = sphi 0, %s27
      %s31 = sphi 0, %s28
      %s32 = sphi 0, %s29
      %s33 = sphi 0, %s30
      %s49 = sphi 0, %s51
      %s52 = sphi 0, %s49
      %s53 = sphi 0, %s52
      %s69 = sphi 0, %s53
      %s79 = sphi 0, %s81
      %s82 = sphi 0, %s79
      %s83 = sphi 0, %s82
      %s99 = sphi 0, %s83
      %s107 = sphi 0, %s109
      %s110 = sphi 0, %s107
      %s111 = sphi 0, %s110
      %s127 = sphi 0, %s111
      %s135 = sphi 0, %s137
      %s138 = sphi 0, %s135
      %s139 = sphi 0, %s138
      %s155 = sphi 0, %s139
    $region4: #{tpu_custom_call.1} parent=1 // loop_header_branch
      %21 = sbr.rel (%p19) target = $region8
    $region5: #{tpu_custom_call.1} parent=1 // loop_body
      %s23 = ssub.s32 %s18, 1
      %s24 = ssub.s32 %s18, 2
      %s34 = sadd.s32 1, %s27
      %p35 = scmp.ge.s32.totalorder %s34, 1
      %s36 = scalar_select %p35, 0, %s34
      %s37 = sadd.s32 1, %s26
      %s38 = scalar_select %p35, %s37, %s26
      %p39 = scmp.ge.s32.totalorder %s38, 1
      %s40 = scalar_select %p39, 0, %s38
      %s41 = sadd.s32 1, %s25
      %s42 = scalar_select %p39, %s41, %s25
      %p43 = scmp.ge.s32.totalorder %s42, 4
      %s44 = scalar_select %p43, 0, %s42
      %s45 = sadd.s32 %s25, %s27
      %s46 = sadd.s32 %s44, %s36
      %s47 = ssub.s32 %s45, %s46
      %p48 = scmp.eq.s32.totalorder %s47, 0
      %s50 = sadd.s32 %s49, 1
      %s51 = scalar_select %p48, %s49, %s50
      %p54 = pneg %p48
      %p55 = scmp.eq.s32.totalorder %s18, 3
      %p56 = por %p54, %p55
      %p57 = scmp.ne.s32.totalorder %s49, %s52
      %p58 = scmp.eq.s32.totalorder %s18, 0
      %p59 = por %p57, %p58
      %p60 = scmp.ne.s32.totalorder %s49, %s52
      %p61 = scmp.eq.s32.totalorder %s23, 3
      %p62 = por %p60, %p61
      %p63 = scmp.ne.s32.totalorder %s52, %s53
      %p64 = scmp.eq.s32.totalorder %s23, 0
      %p65 = por %p63, %p64
      %p66 = scmp.ne.s32.totalorder %s52, %s53
      %p67 = scmp.eq.s32.totalorder %s24, 3
      %p68 = por %p66, %p67
      %p70 = scmp.ne.s32.totalorder %s53, %s69
      %p71 = scmp.eq.s32.totalorder %s24, 0
      %p72 = por %p70, %p71
      %s73 = ssub.s32 %s25, %s44
      %s74 = ssub.s32 %s27, %s36
      %s75 = sor.u32 %s73, %s74
      %s76 = ssub.s32 %s26, %s40
      %s77 = sor.u32 %s75, %s76
      %p78 = scmp.eq.s32.totalorder %s77, 0
      %s80 = sadd.s32 %s79, 1
      %s81 = scalar_select %p78, %s79, %s80
      %p84 = pneg %p78
      %p85 = scmp.eq.s32.totalorder %s18, 3
      %p86 = por %p84, %p85
      %p87 = scmp.ne.s32.totalorder %s79, %s82
      %p88 = scmp.eq.s32.totalorder %s18, 0
      %p89 = por %p87, %p88
      %p90 = scmp.ne.s32.totalorder %s79, %s82
      %p91 = scmp.eq.s32.totalorder %s23, 3
      %p92 = por %p90, %p91
      %p93 = scmp.ne.s32.totalorder %s82, %s83
      %p94 = scmp.eq.s32.totalorder %s23, 0
      %p95 = por %p93, %p94
      %p96 = scmp.ne.s32.totalorder %s82, %s83
      %p97 = scmp.eq.s32.totalorder %s24, 3
      %p98 = por %p96, %p97
      %p100 = scmp.ne.s32.totalorder %s83, %s99
      %p101 = scmp.eq.s32.totalorder %s24, 0
      %p102 = por %p100, %p101
      %s103 = ssub.s32 %s25, %s44
      %s104 = ssub.s32 %s26, %s40
      %s105 = sor.u32 %s103, %s104
      %p106 = scmp.eq.s32.totalorder %s105, 0
      %s108 = sadd.s32 %s107, 1
      %s109 = scalar_select %p106, %s107, %s108
      %p112 = pneg %p106
      %p113 = scmp.eq.s32.totalorder %s18, 3
      %p114 = por %p112, %p113
      %p115 = scmp.ne.s32.totalorder %s107, %s110
      %p116 = scmp.eq.s32.totalorder %s18, 0
      %p117 = por %p115, %p116
      %p118 = scmp.ne.s32.totalorder %s107, %s110
      %p119 = scmp.eq.s32.totalorder %s23, 3
      %p120 = por %p118, %p119
      %p121 = scmp.ne.s32.totalorder %s110, %s111
      %p122 = scmp.eq.s32.totalorder %s23, 0
      %p123 = por %p121, %p122
      %p124 = scmp.ne.s32.totalorder %s110, %s111
      %p125 = scmp.eq.s32.totalorder %s24, 3
      %p126 = por %p124, %p125
      %p128 = scmp.ne.s32.totalorder %s111, %s127
      %p129 = scmp.eq.s32.totalorder %s24, 0
      %p130 = por %p128, %p129
      %s131 = sadd.s32 %s25, %s26
      %s132 = sadd.s32 %s44, %s40
      %s133 = ssub.s32 %s131, %s132
      %p134 = scmp.eq.s32.totalorder %s133, 0
      %s136 = sadd.s32 %s135, 1
      %s137 = scalar_select %p134, %s135, %s136
      %p140 = pneg %p134
      %p141 = scmp.eq.s32.totalorder %s18, 3
      %p142 = por %p140, %p141
      %p143 = scmp.ne.s32.totalorder %s135, %s138
      %p144 = scmp.eq.s32.totalorder %s18, 0
      %p145 = por %p143, %p144
      %p146 = scmp.ne.s32.totalorder %s135, %s138
      %p147 = scmp.eq.s32.totalorder %s23, 3
      %p148 = por %p146, %p147
      %p149 = scmp.ne.s32.totalorder %s138, %s139
      %p150 = scmp.eq.s32.totalorder %s23, 0
      %p151 = por %p149, %p150
      %p152 = scmp.ne.s32.totalorder %s138, %s139
      %p153 = scmp.eq.s32.totalorder %s24, 3
      %p154 = por %p152, %p153
      %p156 = scmp.ne.s32.totalorder %s139, %s155
      %p157 = scmp.eq.s32.totalorder %s24, 0
      %p158 = por %p156, %p157
      %p159 = scmp.le.s32.totalorder 1, %s18
      %p160 = scmp.lt.s32.totalorder %s18, 5
      %p161 = pnand %p159, %p160
      %p162 = pneg %p161
      // Predicated region
      $region9: #{tpu_custom_call.1} parent=5 // pred_check
        _
      $region10: #{tpu_custom_call.1} parent=5 // pred_check_branch
        %164 = sbr.rel (%p161) target = $region12
      $region11: #{tpu_custom_call.1} parent=5 // pred_region
        %s165 = ssub.s32 %s18, 1
      $region12: #{tpu_custom_call.1} parent=5 // pred_fallthru
        _
      %p166 = scmp.lt.s32.totalorder %s18, 4
      // Predicated region
      $region13: #{tpu_custom_call.1} parent=5 // pred_check
        %p167 = pneg %p166
      $region14: #{tpu_custom_call.1} parent=5 // pred_check_branch
        %169 = sbr.rel (%p167) target = $region16
      $region15: #{tpu_custom_call.1} parent=5 // pred_region
        // Predicated region
        $region17: #{tpu_custom_call.1} parent=15 // pred_check
          %p170 = pneg %p59
        $region18: #{tpu_custom_call.1} parent=15 // pred_check_branch
          %172 = sbr.rel (%p170) target = $region20
        $region19: #{tpu_custom_call.1} parent=15 // pred_region
          %s173 = sand.u32 %s49, 1
          %s174 = scalar_lea.sflag [#allocation4], %s173
          %s175 = sand.u32 %s49, 1
          %s176 = smul.addr %s175, 8
          %s177 = scalar_lea.vmem [#allocation3], %s176
          %s178 = sadd.s32 %s25, %s27
          %180 = vsyncadd %s174, 0
          %s181 = smul.addr %s178, 8
          %s182 = scalar_lea.hbm %s0, %s181
          %s184 = sshll.u32 %s182, 4
          %s185 = int_to_ptr.hbm [resolvable:$true] %s184
          %s186 = sshll.u32 %s177, 4
          %s187 = int_to_ptr.vmem [resolvable:$true] %s186
          %189 = dma.hbm_to_vmem [thread:$0]  %s185, 128, %s187, %s174
        $region20: #{tpu_custom_call.1} parent=15 // pred_fallthru
          _
        // Predicated region
        $region21: #{tpu_custom_call.1} parent=15 // pred_check
          %p190 = pneg %p89
        $region22: #{tpu_custom_call.1} parent=15 // pred_check_branch
          %192 = sbr.rel (%p190) target = $region24
        $region23: #{tpu_custom_call.1} parent=15 // pred_region
          %s193 = sand.u32 %s18, 1
          %s194 = scalar_lea.sflag [#allocation7], %s193
          %s195 = sand.u32 %s79, 1
          %s196 = smul.addr %s195, 64
          %s197 = scalar_lea.vmem [#allocation6], %s196
          %s198 = smul.u32 16, %s27
          %200 = vsyncadd %s194, 0
          %s201 = sadd.s32 %s26, %s198
          %s202 = smul.addr %s25, 16
          %s203 = sadd.s32 %s201, %s202
          %s204 = smul.addr %s203, 4
          %s205 = scalar_lea.hbm %s1, %s204
          %s206 = sshll.u32 %s205, 4
          %s207 = int_to_ptr.hbm [resolvable:$true] %s206
          %s208 = sshll.u32 %s197, 4
          %s209 = int_to_ptr.vmem [resolvable:$true] %s208
          %214 = dma.hbm_to_vmem [thread:$0]  %s207, 1024, %s209, %s194, 64, 64, 4
        $region24: #{tpu_custom_call.1} parent=15 // pred_fallthru
          _
        // Predicated region
        $region25: #{tpu_custom_call.1} parent=15 // pred_check
          %p215 = pneg %p117
        $region26: #{tpu_custom_call.1} parent=15 // pred_check_branch
          %217 = sbr.rel (%p215) target = $region28
        $region27: #{tpu_custom_call.1} parent=15 // pred_region
          %s218 = sand.u32 %s18, 1
          %s219 = scalar_lea.sflag [#allocation7], %s218
          %s220 = sand.u32 %s107, 1
          %s221 = scalar_lea.vmem [#allocation8], %s220
          %223 = vsyncadd %s219, 0
          %s224 = sadd.s32 %s26, %s25
          %s225 = scalar_lea.hbm %s2, %s224
          %s227 = sshll.u32 %s225, 4
          %s228 = int_to_ptr.hbm [resolvable:$true] %s227
          %s229 = sshll.u32 %s221, 4
          %s230 = int_to_ptr.vmem [resolvable:$true] %s229
          %232 = dma.hbm_to_vmem [thread:$0]  %s228, 16, %s230, %s219
        $region28: #{tpu_custom_call.1} parent=15 // pred_fallthru
          _
      $region16: #{tpu_custom_call.1} parent=5 // pred_fallthru
        _
      %p233 = scmp.le.s32.totalorder 1, %s18
      %p234 = scmp.lt.s32.totalorder %s18, 5
      %p235 = pnand %p233, %p234
      %p236 = pneg %p235
      // Predicated region
      $region29: #{tpu_custom_call.1} parent=5 // pred_check
        _
      $region30: #{tpu_custom_call.1} parent=5 // pred_check_branch
        %238 = sbr.rel (%p235) target = $region32
      $region31: #{tpu_custom_call.1} parent=5 // pred_region
        %s239 = ssub.s32 %s18, 1
        %s240 = sand.u32 %s52, 1
        %s241 = scalar_lea.sflag [#allocation4], %s240
        %s242 = sand.u32 %s52, 1
        %s243 = smul.addr %s242, 8
        %s244 = scalar_lea.vmem [#allocation3], %s243
        // Predicated region
        $region33: #{tpu_custom_call.1} parent=31 // pred_check
          %p245 = pneg %p65
        $region34: #{tpu_custom_call.1} parent=31 // pred_check_branch
          %247 = sbr.rel (%p245) target = $region36
        $region35: #{tpu_custom_call.1} parent=31 // pred_region
          %249 = dma.done %s241, 128
        $region36: #{tpu_custom_call.1} parent=31 // pred_fallthru
          _
        %s250 = sand.u32 %s23, 1
        %s251 = scalar_lea.sflag [#allocation7], %s250
        %s252 = sand.u32 %s82, 1
        %s253 = smul.addr %s252, 64
        %s254 = scalar_lea.vmem [#allocation6], %s253
        // Predicated region
        $region37: #{tpu_custom_call.1} parent=31 // pred_check
          %p255 = pneg %p95
        $region38: #{tpu_custom_call.1} parent=31 // pred_check_branch
          %257 = sbr.rel (%p255) target = $region40
        $region39: #{tpu_custom_call.1} parent=31 // pred_region
          %259 = dma.done %s251, 1024
        $region40: #{tpu_custom_call.1} parent=31 // pred_fallthru
          _
        %s260 = sand.u32 %s23, 1
        %s261 = scalar_lea.sflag [#allocation7], %s260
        %s262 = sand.u32 %s110, 1
        %s263 = scalar_lea.vmem [#allocation8], %s262
        // Predicated region
        $region41: #{tpu_custom_call.1} parent=31 // pred_check
          %p264 = pneg %p123
        $region42: #{tpu_custom_call.1} parent=31 // pred_check_branch
          %266 = sbr.rel (%p264) target = $region44
        $region43: #{tpu_custom_call.1} parent=31 // pred_region
          %268 = dma.done %s261, 16
        $region44: #{tpu_custom_call.1} parent=31 // pred_fallthru
          _
        %s269 = sand.u32 %s52, 1
        %s270 = scalar_lea.sflag [#allocation4], %s269
        %s271 = sand.u32 %s52, 1
        %s272 = smul.addr %s271, 8
        %s273 = scalar_lea.vmem [#allocation3], %s272
        %p274 = pneg %p65
        %p275 = pneg %p62
        %s276 = sand.u32 %s23, 1
        %s277 = scalar_lea.sflag [#allocation7], %s276
        %s278 = sand.u32 %s82, 1
        %s279 = smul.addr %s278, 64
        %s280 = scalar_lea.vmem [#allocation6], %s279
        %p281 = pneg %p95
        %p282 = pneg %p92
        %s283 = sand.u32 %s23, 1
        %s284 = scalar_lea.sflag [#allocation7], %s283
        %s285 = sand.u32 %s110, 1
        %s286 = scalar_lea.vmem [#allocation8], %s285
        %p287 = pneg %p123
        %p288 = pneg %p120
        %p289 = pneg %p151
        %p290 = pneg %p148
        %s291 = sand.u32 %s138, 1
        %s292 = scalar_lea.sflag [#allocation5], %s291
        %s293 = sand.u32 %s138, 1
        %s294 = smul.addr %s293, 8
        %s295 = scalar_lea.vmem [#allocation9], %s294
        %s296 = sadd.s32 %s28, %s30
        %s297 = smul.u32 16, %s30
        %s298 = sadd.s32 %s28, %s29
        %p299 = scmp.eq.s32.totalorder %s30, 0
        // Predicated region
        $region45: #{tpu_custom_call.1} parent=31 // pred_check
          %p300 = pneg %p299
        $region46: #{tpu_custom_call.1} parent=31 // pred_check_branch
          %302 = sbr.rel (%p300) target = $region48
        $region47: #{tpu_custom_call.1} parent=31 // pred_region
          %v303 = vld [vmem:[%s263] sm:$0x1]
          %v305 = vperm.slane %v303, 0
          %307 = vst [vmem:[#allocation2] sm:$0xff] %v305
        $region48: #{tpu_custom_call.1} parent=31 // pred_fallthru
          _
        %v308 = vld [vmem:[#allocation2] sm:$0xff]
        %v309 = vld [vmem:[%s244] sm:$0xff]
        %v310 = vpack.c.bf16 %v309, %v309
        %v311 = vld [vmem:[%s254] sm:$0xf]
        %v312 = vld [vmem:[%s254 + $0x4] sm:$0xf]
        %v313 = vld [vmem:[%s254 + $0x8] sm:$0xf]
        %v314 = vld [vmem:[%s254 + $0xc] sm:$0xf]
        %v315 = vld [vmem:[%s254 + $0x10] sm:$0xf]
        %v316 = vld [vmem:[%s254 + $0x14] sm:$0xf]
        %v317 = vld [vmem:[%s254 + $0x18] sm:$0xf]
        %v318 = vld [vmem:[%s254 + $0x1c] sm:$0xf]
        %v319 = vld [vmem:[%s254 + $0x20] sm:$0xf]
        %v320 = vld [vmem:[%s254 + $0x24] sm:$0xf]
        %v321 = vld [vmem:[%s254 + $0x28] sm:$0xf]
        %v322 = vld [vmem:[%s254 + $0x2c] sm:$0xf]
        %v323 = vld [vmem:[%s254 + $0x30] sm:$0xf]
        %v324 = vld [vmem:[%s254 + $0x34] sm:$0xf]
        %v325 = vld [vmem:[%s254 + $0x38] sm:$0xf]
        %v326 = vld [vmem:[%s254 + $0x3c] sm:$0xf]
        %v343 = vunpack.c.l.b16 %v311
        %v344 = vunpack.c.l.b16 %v312
        %v345 = vunpack.c.l.b16 %v313
        %v346 = vunpack.c.l.b16 %v314
        %v347 = vunpack.c.l.b16 %v315
        %v348 = vunpack.c.l.b16 %v316
        %v349 = vunpack.c.l.b16 %v317
        %v350 = vunpack.c.l.b16 %v318
        %v351 = vunpack.c.l.b16 %v319
        %v352 = vunpack.c.l.b16 %v320
        %v353 = vunpack.c.l.b16 %v321
        %v354 = vunpack.c.l.b16 %v322
        %v355 = vunpack.c.l.b16 %v323
        %v356 = vunpack.c.l.b16 %v324
        %v357 = vunpack.c.l.b16 %v325
        %v358 = vunpack.c.l.b16 %v326
        %v359 = vpack.c.b16 %v344, %v343
        %v360 = vpack.c.b16 %v346, %v345
        %v361 = vpack.c.b16 %v348, %v347
        %v362 = vpack.c.b16 %v350, %v349
        %v363 = vpack.c.b16 %v352, %v351
        %v364 = vpack.c.b16 %v354, %v353
        %v365 = vpack.c.b16 %v356, %v355
        %v366 = vpack.c.b16 %v358, %v357
        %375 = vmatpush.bf16.msra.mxu0 %v366
        %376 = vmatpush.bf16.msra.mxu0 %v365
        %377 = vmatpush.bf16.msra.mxu0 %v364
        %378 = vmatpush.bf16.msra.mxu0 %v363
        %379 = vmatpush.bf16.msra.mxu0 %v362
        %380 = vmatpush.bf16.msra.mxu0 %v361
        %381 = vmatpush.bf16.msra.mxu0 %v360
        %382 = vmatpush.bf16.msra.mxu0 %v359
        %383 = vmatmul.bf16.gmra.mxu0 %v310
        %v384 = vpop.f32.mrf.mxu0
        %v385 = vadd.f32 0.0, %v384
        %v386 = vpop.f32.mrf.mxu0
        %387 = vdwg.mxu0
        %v388 = vadd.f32 %v308, %v385
        %389 = vst [vmem:[#allocation2] sm:$0xff] %v388
        // Predicated region
        $region49: #{tpu_custom_call.1} parent=31 // pred_check
          %p390 = pneg %p299
        $region50: #{tpu_custom_call.1} parent=31 // pred_check_branch
          %392 = sbr.rel (%p390) target = $region52
        $region51: #{tpu_custom_call.1} parent=31 // pred_region
          %v393 = vld [vmem:[#allocation2] sm:$0xff]
          %394 = vst [vmem:[%s295] sm:$0xff] %v393
        $region52: #{tpu_custom_call.1} parent=31 // pred_fallthru
          _
        %s395 = sand.u32 %s138, 1
        %s396 = scalar_lea.sflag [#allocation5], %s395
        %s397 = sand.u32 %s138, 1
        %s398 = smul.addr %s397, 8
        %s399 = scalar_lea.vmem [#allocation9], %s398
        // Predicated region
        $region53: #{tpu_custom_call.1} parent=31 // pred_check
          %p400 = pneg %p148
        $region54: #{tpu_custom_call.1} parent=31 // pred_check_branch
          %402 = sbr.rel (%p400) target = $region56
        $region55: #{tpu_custom_call.1} parent=31 // pred_region
          %s403 = sadd.s32 %s28, %s29
          %405 = vsyncadd %s396, 0
          %s406 = smul.addr %s403, 8
          %s407 = scalar_lea.hbm %s3, %s406
          %s409 = sshll.u32 %s399, 4
          %s410 = int_to_ptr.vmem [resolvable:$true] %s409
          %s411 = sshll.u32 %s407, 4
          %s412 = int_to_ptr.hbm [resolvable:$true] %s411
          %414 = dma.vmem_to_hbm [thread:$0]  %s410, 128, %s412, %s396
        $region56: #{tpu_custom_call.1} parent=31 // pred_fallthru
          _
      $region32: #{tpu_custom_call.1} parent=5 // pred_fallthru
        _
      %p415 = scmp.le.s32.totalorder 2, %s18
      // Predicated region
      $region57: #{tpu_custom_call.1} parent=5 // pred_check
        %p416 = pneg %p415
      $region58: #{tpu_custom_call.1} parent=5 // pred_check_branch
        %418 = sbr.rel (%p416) target = $region60
      $region59: #{tpu_custom_call.1} parent=5 // pred_region
        %s419 = ssub.s32 %s18, 2
        // Predicated region
        $region61: #{tpu_custom_call.1} parent=59 // pred_check
          %p420 = pneg %p154
        $region62: #{tpu_custom_call.1} parent=59 // pred_check_branch
          %422 = sbr.rel (%p420) target = $region64
        $region63: #{tpu_custom_call.1} parent=59 // pred_region
          %s423 = sand.u32 %s139, 1
          %s424 = scalar_lea.sflag [#allocation5], %s423
          %s425 = sand.u32 %s139, 1
          %s426 = smul.addr %s425, 8
          %s427 = scalar_lea.vmem [#allocation9], %s426
          %429 = dma.done %s424, 128
        $region64: #{tpu_custom_call.1} parent=59 // pred_fallthru
          _
      $region60: #{tpu_custom_call.1} parent=5 // pred_fallthru
        _
    $region6: #{tpu_custom_call.1} parent=1 // loop_footer
      %s22 = sadd.s32 1, %s18
    $region7: #{tpu_custom_call.1} parent=1 // loop_footer_branch
      %17 = sbr.rel target = $region3
    $region8: #{tpu_custom_call.1} parent=1 // loop_exit
      _
    %430 = vsyncpa [#allocation4], 1
    %s431 = scalar_lea.sflag [#allocation4], 1
    %432 = vsyncpa %s431, 1
    %433 = vsyncpa [#allocation7], 1
    %s434 = scalar_lea.sflag [#allocation7], 1
    %435 = vsyncpa %s434, 1
    %436 = vsyncpa [#allocation5], 1
    %s437 = scalar_lea.sflag [#allocation5], 1
    %438 = vsyncpa %s437, 1

</llo_original>
